<compile_context>
chip_gen: v6e
topology: v6e:2x2x1
jax: 0.10.0
libtpu: 0.0.40
codegen_flags: <defaults>
</compile_context>

<pallas_src>
import functools
import types

import jax
import jax.numpy as jnp
from jax.experimental import pallas as pl
from jax.experimental.pallas import tpu as pltpu

_EPS = 1e-8          # torch F.cosine_similarity eps
_PAIR_TILE = 256     # Loss2 pair tile (<=512 keeps tile temps well under v7x VMEM)
_ROW_TILE = 256      # Loss1 / Loss3 row tile


def _round_up(x, m):
    return ((x + m - 1) // m) * m


def _pad_rows(x, rows):
    pad = rows - x.shape[0]
    if pad == 0:
        return x
    return jnp.pad(x, [(0, pad)] + [(0, 0)] * (x.ndim - 1))


# ----------------------------- Loss1: CrossEntropy ---------------------------
def _ce_kernel(y_ref, lab_ref, out_ref, *, n_valid):
    tm, c = y_ref.shape
    logits = y_ref[...].astype(jnp.float32)              # (tm, C)
    lab = lab_ref[...]                                    # (tm, 1) int32
    m = jnp.max(logits, axis=-1, keepdims=True)
    lse = m + jnp.log(jnp.sum(jnp.exp(logits - m), axis=-1, keepdims=True))
    cls = jax.lax.broadcasted_iota(jnp.int32, (tm, c), 1)
    picked = jnp.sum(jnp.where(cls == lab, logits, 0.0), axis=-1, keepdims=True)
    row = pl.program_id(0) * tm + jax.lax.broadcasted_iota(jnp.int32, (tm, 1), 0)
    per_row = jnp.where(row < n_valid, lse - picked, 0.0)  # mask padded rows
    total = jnp.sum(per_row, axis=0, keepdims=True)        # (1, 1)
    lane = jax.lax.broadcasted_iota(jnp.int32, (1, 128), 1)
    out_ref[...] = jnp.where(lane == 0, total, 0.0)        # lane-dense partial


# ------------------------ Loss2: SemanticSimilarity --------------------------
def _sem_kernel(lab_i_ref, lab_j_ref, aij_ref, ei_ref, ej_ref, out_ref, acc_ref,
                *, margin, n_valid):
    i = pl.program_id(0)
    j = pl.program_id(1)
    tm = ei_ref.shape[0]
    tn = ej_ref.shape[0]
    cp = aij_ref.shape[1]

    @pl.when(j == 0)
    def _():
        acc_ref[...] = jnp.zeros_like(acc_ref)

    eps2 = jnp.float32(_EPS * _EPS)
    ei = ei_ref[...].astype(jnp.float32)                   # (tm, D)
    ej = ej_ref[...].astype(jnp.float32)                   # (tn, D)
    # Pre-normalize rows (1/max(|e|, eps) == rsqrt(max(|e|^2, eps^2))); the NxN
    # tile then needs only one matmul + subtract.
    eni = ei * jax.lax.rsqrt(jnp.maximum(jnp.sum(ei * ei, -1, keepdims=True), eps2))
    enj = ej * jax.lax.rsqrt(jnp.maximum(jnp.sum(ej * ej, -1, keepdims=True), eps2))
    cos = jax.lax.dot_general(eni, enj, (((1,), (1,)), ((), ())),
                              preferred_element_type=jnp.float32)      # (tm, tn)
    emb_dist = 1.0 - cos

    # Rebuild pairwise class-distance tile in-kernel: onehot_i @ Aij @ onehot_j^T
    li = lab_i_ref[...]                                    # (tm, 1) int32
    lj = lab_j_ref[...]                                    # (tn, 1) int32
    oh_i = (jax.lax.broadcasted_iota(jnp.int32, (tm, cp), 1) == li).astype(jnp.float32)
    oh_j = (jax.lax.broadcasted_iota(jnp.int32, (tn, cp), 1) == lj).astype(jnp.float32)
    row_dist = jnp.dot(oh_i, aij_ref[...], preferred_element_type=jnp.float32)
    dcls = jax.lax.dot_general(row_dist, oh_j, (((1,), (1,)), ((), ())),
                               preferred_element_type=jnp.float32)     # (tm, tn)

    row = i * tm + jax.lax.broadcasted_iota(jnp.int32, (tm, tn), 0)
    col = j * tn + jax.lax.broadcasted_iota(jnp.int32, (tm, tn), 1)
    valid = (row < n_valid) & (col < n_valid)

    diff = emb_dist - dcls
    cond = (dcls < margin) & (emb_dist < margin) & valid
    contrib = jnp.where(cond, diff * diff, 0.0)            # fused sigma * diff^2

    acc_ref[...] += jnp.sum(jnp.sum(contrib, axis=1, keepdims=True),
                            axis=0, keepdims=True)

    @pl.when(j == pl.num_programs(1) - 1)
    def _():
        lane = jax.lax.broadcasted_iota(jnp.int32, (1, 128), 1)
        out_ref[...] = jnp.where(lane == 0, acc_ref[...], 0.0)


# --------------------------- Loss3: CrossModalGap ----------------------------
def _gap_kernel(img_ref, txt_ref, out_ref, *, n_valid):
    tb = img_ref.shape[0]
    eps2 = jnp.float32(_EPS * _EPS)
    a = img_ref[...].astype(jnp.float32)
    t = txt_ref[...].astype(jnp.float32)
    w12 = jnp.sum(a * t, axis=-1, keepdims=True)
    w1 = jnp.sum(a * a, axis=-1, keepdims=True)
    w2 = jnp.sum(t * t, axis=-1, keepdims=True)
    cos = (w12 * jax.lax.rsqrt(jnp.maximum(w1, eps2))
               * jax.lax.rsqrt(jnp.maximum(w2, eps2)))
    row = pl.program_id(0) * tb + jax.lax.broadcasted_iota(jnp.int32, (tb, 1), 0)
    per_row = jnp.where(row < n_valid, 1.0 - cos, 0.0)
    total = jnp.sum(per_row, axis=0, keepdims=True)
    lane = jax.lax.broadcasted_iota(jnp.int32, (1, 128), 1)
    out_ref[...] = jnp.where(lane == 0, total, 0.0)


# --------------------------------- wrapper -----------------------------------
def big_loss(y_hat, all_embs, img_embs, text_embs, labels, Aij, cfg):
    """JAX/Pallas equivalent of BigLoss.forward."""
    N, C = y_hat.shape
    D = all_embs.shape[1]
    B, Dg = img_embs.shape

    w_class = float(cfg.weight_class_L)
    w_sem = float(cfg.weight_semantic_L)
    w_gap = float(cfg.weight_gap_L)
    margin = float(cfg.margin_semantic)

    labels2d = labels.astype(jnp.int32).reshape(N, 1)

    # ---- Loss1: cross entropy, tiled over row blocks -------------------------
    # TODO(synk): for vocab-scale C, tile over C with an online log-sum-exp.
    tm1 = min(_ROW_TILE, _round_up(N, 8))
    np1 = _round_up(N, tm1)
    nb1 = np1 // tm1
    ce_partials = pl.pallas_call(
        functools.partial(_ce_kernel, n_valid=N),
        out_shape=jax.ShapeDtypeStruct((nb1, 128), jnp.float32),
        grid_spec=pltpu.PrefetchScalarGridSpec(
            num_scalar_prefetch=0,
            grid=(nb1,),
            in_specs=[pl.BlockSpec((tm1, C), lambda i: (i, 0)),
                      pl.BlockSpec((tm1, 1), lambda i: (i, 0))],
            out_specs=pl.BlockSpec((1, 128), lambda i: (i, 0))),
        compiler_params=pltpu.CompilerParams(dimension_semantics=("parallel",)),
    )(_pad_rows(y_hat, np1), _pad_rows(labels2d, np1))
    l1 = w_class * (jnp.sum(ce_partials) / N)

    # ---- Loss2: semantic similarity over NxN pairs, 2-D tiled -----------------
    t2 = min(_PAIR_TILE, _round_up(N, 128))
    np2 = _round_up(N, t2)
    nb2 = np2 // t2
    cp = _round_up(C, 128)   # pad class axis so one-hot matmuls are lane-aligned
    aij_p = jnp.zeros((cp, cp), jnp.float32).at[:C, :C].set(Aij.astype(jnp.float32))
    emb_p = _pad_rows(all_embs, np2)
    lab_p = _pad_rows(labels2d, np2)
    sem_partials = pl.pallas_call(
        functools.partial(_sem_kernel, margin=margin, n_valid=N),
        out_shape=jax.ShapeDtypeStruct((nb2, 128), jnp.float32),
        grid_spec=pltpu.PrefetchScalarGridSpec(
            num_scalar_prefetch=0,
            grid=(nb2, nb2),                       # reduction (col) axis last
            in_specs=[pl.BlockSpec((t2, 1), lambda i, j: (i, 0)),   # row labels
                      pl.BlockSpec((t2, 1), lambda i, j: (j, 0)),   # col labels
                      pl.BlockSpec((cp, cp), lambda i, j: (0, 0)),  # Aij
                      pl.BlockSpec((t2, D), lambda i, j: (i, 0)),   # row embs
                      pl.BlockSpec((t2, D), lambda i, j: (j, 0))],  # col embs
            out_specs=pl.BlockSpec((1, 128), lambda i, j: (i, 0)),
            scratch_shapes=[pltpu.VMEM((1, 1), jnp.float32)]),
        compiler_params=pltpu.CompilerParams(
            dimension_semantics=("parallel", "arbitrary")),
    )(lab_p, lab_p, aij_p, emb_p, emb_p)
    l2 = w_sem * (jnp.sum(sem_partials) / (N * N))

    # ---- Loss3: cross-modal gap, tiled over row blocks ------------------------
    tm3 = min(_ROW_TILE, _round_up(B, 8))
    np3 = _round_up(B, tm3)
    nb3 = np3 // tm3
    gap_partials = pl.pallas_call(
        functools.partial(_gap_kernel, n_valid=B),
        out_shape=jax.ShapeDtypeStruct((nb3, 128), jnp.float32),
        grid_spec=pltpu.PrefetchScalarGridSpec(
            num_scalar_prefetch=0,
            grid=(nb3,),
            in_specs=[pl.BlockSpec((tm3, Dg), lambda i: (i, 0)),
                      pl.BlockSpec((tm3, Dg), lambda i: (i, 0))],
            out_specs=pl.BlockSpec((1, 128), lambda i: (i, 0))),
        compiler_params=pltpu.CompilerParams(dimension_semantics=("parallel",)),
    )(_pad_rows(img_embs, np3), _pad_rows(text_embs, np3))
    l3 = w_gap * (jnp.sum(gap_partials) / B)

    loss = l1 + l2 + l3
    # mimic torch's `(loss, (loss1.item(), loss2.item(), loss3.item()))`
    # (the torch reference reports the *weighted* per-term values)
    return loss, (l1, l2, l3)


# ------------------------------ pure-JAX reference ----------------------------
def _reference(y_hat, all_embs, img_embs, text_embs, labels, Aij, cfg):
    eps = _EPS
    lse = jax.scipy.special.logsumexp(y_hat, axis=-1)
    picked = jnp.take_along_axis(y_hat, labels[:, None], axis=-1)[:, 0]
    r1 = cfg.weight_class_L * jnp.mean(lse - picked)

    norm = jnp.maximum(jnp.sqrt(jnp.sum(all_embs ** 2, -1, keepdims=True)), eps)
    en = all_embs / norm
    ed = 1.0 - en @ en.T
    dc = Aij[labels[:, None], labels[None, :]]
    sigma = ((dc < cfg.margin_semantic) & (ed < cfg.margin_semantic)).astype(jnp.float32)
    r2 = cfg.weight_semantic_L * jnp.mean(sigma * (ed - dc) ** 2)

    na = jnp.maximum(jnp.sqrt(jnp.sum(img_embs ** 2, -1)), eps)
    nb = jnp.maximum(jnp.sqrt(jnp.sum(text_embs ** 2, -1)), eps)
    cos3 = jnp.sum(img_embs * text_embs, -1) / (na * nb)
    r3 = cfg.weight_gap_L * jnp.mean(1.0 - cos3)
    return r1, r2, r3


if __name__ == "__main__":
    N, C, D = 8, 5, 32      # batch, num classes, embedding dim

    cfg = types.SimpleNamespace(
        margin_semantic=0.7,
        weight_class_L=1.0,
        weight_semantic_L=0.5,
        weight_gap_L=0.25,
    )

    # Deterministic class-distance matrix Aij (symmetric, zero diagonal, in [0,1]).
    idx = jnp.arange(C, dtype=jnp.float32)
    Aij = jnp.abs(idx[:, None] - idx[None, :]) / float(C - 1)

    key = jax.random.PRNGKey(0)
    k1, k2, k3, k4, k5 = jax.random.split(key, 5)
    y_hat = jax.random.normal(k1, (N, C), dtype=jnp.float32)
    all_embs = jax.random.normal(k2, (N, D), dtype=jnp.float32)
    img_embs = jax.random.normal(k3, (N, D), dtype=jnp.float32)
    text_embs = jax.random.normal(k4, (N, D), dtype=jnp.float32)
    labels = jax.random.randint(k5, (N,), 0, C, dtype=jnp.int32)

    loss, (l1, l2, l3) = big_loss(y_hat, all_embs, img_embs, text_embs,
                                  labels, Aij, cfg)
    jax.block_until_ready(loss)
    jax.block_until_ready((l1, l2, l3))

    r1, r2, r3 = _reference(y_hat, all_embs, img_embs, text_embs, labels, Aij, cfg)
    for got, ref in ((l1, r1), (l2, r2), (l3, r3)):
        assert abs(float(got) - float(ref)) < 1e-4, (float(got), float(ref))

    print("KERNEL_OK")
</pallas_src>

<mosaic_0001>
module attributes {stable_mosaic.version = 11 : i64} {
  func.func @_ce_kernel(%arg0: i32, %arg1: memref<8x5xf32, #tpu.memory_space<vmem>>, %arg2: memref<8x1xi32, #tpu.memory_space<vmem>>, %arg3: memref<1x128xf32, #tpu.memory_space<vmem>>) attributes {dimension_semantics = [#tpu.dimension_semantics<parallel>], iteration_bounds = array<i64: 1>, scalar_prefetch = 0 : i64, scratch_operands = 0 : i64, tpu.core_type = #tpu.core_type<tc>, window_params = [{transform_indices = @transform_0, window_bounds = array<i64: 8, 5>}, {transform_indices = @transform_1, window_bounds = array<i64: 8, 1>}, {transform_indices = @transform_2, window_bounds = array<i64: 1, 128>}]} {
    %c0 = arith.constant 0 : index
    %c0_0 = arith.constant 0 : index
    %0 = vector.load %arg1[%c0, %c0_0] : memref<8x5xf32, #tpu.memory_space<vmem>>, vector<8x5xf32>
    %c0_1 = arith.constant 0 : index
    %c0_2 = arith.constant 0 : index
    %1 = vector.load %arg2[%c0_1, %c0_2] : memref<8x1xi32, #tpu.memory_space<vmem>>, vector<8x1xi32>
    %cst = arith.constant dense<0xFF800000> : vector<8xf32>
    %2 = vector.multi_reduction <maximumf>, %0, %cst [1] : vector<8x5xf32> to vector<8xf32>
    %3 = vector.shape_cast %2 : vector<8xf32> to vector<8x1xf32>
    %4 = vector.broadcast %3 : vector<8x1xf32> to vector<8x5xf32>
    %5 = arith.subf %0, %4 : vector<8x5xf32>
    %6 = math.exp %5 : vector<8x5xf32>
    %cst_3 = arith.constant dense<0.000000e+00> : vector<8xf32>
    %7 = vector.multi_reduction <add>, %6, %cst_3 [1] : vector<8x5xf32> to vector<8xf32>
    %8 = vector.shape_cast %7 : vector<8xf32> to vector<8x1xf32>
    %9 = math.log %8 : vector<8x1xf32>
    %10 = arith.addf %3, %9 : vector<8x1xf32>
    %11 = tpu.iota {dimensions = array<i32: 1>} : vector<8x5xi32>
    %12 = vector.broadcast %1 : vector<8x1xi32> to vector<8x5xi32>
    %13 = arith.cmpi eq, %11, %12 : vector<8x5xi32>
    %cst_4 = arith.constant 0.000000e+00 : f32
    %14 = vector.broadcast %cst_4 : f32 to vector<8x5xf32>
    %15 = arith.select %13, %0, %14 : vector<8x5xi1>, vector<8x5xf32>
    %cst_5 = arith.constant dense<0.000000e+00> : vector<8xf32>
    %16 = vector.multi_reduction <add>, %15, %cst_5 [1] : vector<8x5xf32> to vector<8xf32>
    %17 = vector.shape_cast %16 : vector<8xf32> to vector<8x1xf32>
    %c8_i32 = arith.constant 8 : i32
    %18 = arith.muli %arg0, %c8_i32 : i32
    %19 = tpu.iota {dimensions = array<i32: 0>} : vector<8x1xi32>
    %20 = vector.broadcast %18 : i32 to vector<8x1xi32>
    %21 = arith.addi %20, %19 : vector<8x1xi32>
    %c8_i32_6 = arith.constant 8 : i32
    %22 = vector.broadcast %c8_i32_6 : i32 to vector<8x1xi32>
    %23 = arith.cmpi slt, %21, %22 : vector<8x1xi32>
    %24 = arith.subf %10, %17 : vector<8x1xf32>
    %cst_7 = arith.constant 0.000000e+00 : f32
    %25 = vector.broadcast %cst_7 : f32 to vector<8x1xf32>
    %26 = arith.select %23, %24, %25 : vector<8x1xi1>, vector<8x1xf32>
    %cst_8 = arith.constant dense<0.000000e+00> : vector<1xf32>
    %27 = vector.multi_reduction <add>, %26, %cst_8 [0] : vector<8x1xf32> to vector<1xf32>
    %28 = vector.shape_cast %27 : vector<1xf32> to vector<1x1xf32>
    %29 = tpu.iota {dimensions = array<i32: 1>} : vector<1x128xi32>
    %c0_i32 = arith.constant 0 : i32
    %30 = vector.broadcast %c0_i32 : i32 to vector<1x128xi32>
    %31 = arith.cmpi eq, %29, %30 : vector<1x128xi32>
    %cst_9 = arith.constant 0.000000e+00 : f32
    %32 = vector.shape_cast %28 : vector<1x1xf32> to vector<1x1xf32>
    %33 = vector.broadcast %32 : vector<1x1xf32> to vector<1x128xf32>
    %34 = vector.broadcast %cst_9 : f32 to vector<1x128xf32>
    %35 = arith.select %31, %33, %34 : vector<1x128xi1>, vector<1x128xf32>
    %c0_10 = arith.constant 0 : index
    %c0_11 = arith.constant 0 : index
    %36 = vector.load %arg3[%c0_10, %c0_11] : memref<1x128xf32, #tpu.memory_space<vmem>>, vector<1x128xf32>
    tpu.vector_store %arg3[%c0_10, %c0_11], %35 {strides = array<i32>} : memref<1x128xf32, #tpu.memory_space<vmem>>, vector<1x128xf32>,
    return
  }
  func.func @transform_0(%arg0: i32) -> (i32, i32) {
    %c0_i32 = arith.constant 0 : i32
    %c0_i32_0 = arith.constant 0 : i32
    return %arg0, %c0_i32 : i32, i32
  }
  func.func @transform_1(%arg0: i32) -> (i32, i32) {
    %c0_i32 = arith.constant 0 : i32
    %c0_i32_0 = arith.constant 0 : i32
    return %arg0, %c0_i32 : i32, i32
  }
  func.func @transform_2(%arg0: i32) -> (i32, i32) {
    %c0_i32 = arith.constant 0 : i32
    %c0_i32_0 = arith.constant 0 : i32
    return %arg0, %c0_i32 : i32, i32
  }
}

</mosaic_0001>

<llo_original>
// kernel: tpu_custom_call.1
$region0: #{tpu_custom_call.1}
  #allocation0 [shape = 'u32[]', space=smem, size = 0x4, offset = 0x4, fixed_abs, tag = 'smem constant byte address 0x4 - core index']
  #allocation1 [shape = 'u32[144,128]{1,0:T(1,128)}', space=vmem, size = 0x12000, scoped, tag = 'internal scratch']
  %s0 = inlined_call_operand.vmem [shape: f32[8,5], index: 0, kind: input, shape index: {}]
  %s1 = inlined_call_operand.vmem [shape: s32[8,1], index: 1, kind: input, shape index: {}]
  %s2 = inlined_call_operand.hbm [shape: f32[1,128], index: 2, kind: output, shape index: {}]
  %s3 = sld [smem:[#allocation0]]
  $region18: #{tpu_custom_call.1} parent=0
    _
  %s5 = ssub.s32 1, %s3
  %s6 = scalar_select 0, %s5, %s3
  $region1: #{tpu_custom_call.1} parent=0
    #allocation2 [shape = 'u8[512]{0}', space=vmem, size = 0x400, scoped, tag = 'output window, operand 0, single buffered']
    #allocation3 [shape = 's32[1]{0}', space=sflag, size = 0x4, scoped, tag = 'scoped memory for tpu_custom_call.1']
    %7 = vsyncpa [#allocation3], 0
    // Predicated region
    $region2: #{tpu_custom_call.1} parent=1 // pred_check
      _
    $region3: #{tpu_custom_call.1} parent=1 // pred_check_branch
      %9 = sbr.rel (0) target = $region5
    $region4: #{tpu_custom_call.1} parent=1 // pred_region
      _
    $region5: #{tpu_custom_call.1} parent=1 // pred_fallthru
      _
    // Predicated region
    $region6: #{tpu_custom_call.1} parent=1 // pred_check
      _
    $region7: #{tpu_custom_call.1} parent=1 // pred_check_branch
      %11 = sbr.rel (0) target = $region9
    $region8: #{tpu_custom_call.1} parent=1 // pred_region
      _
    $region9: #{tpu_custom_call.1} parent=1 // pred_fallthru
      _
    %v12 = vld [vmem:[%s0] sm:$0xff]
    %v13 = vld [vmem:[%s1] sm:$0xff]
    %vm14 = vcmask 39936
    %v15 = vsel %vm14, %v12, -inf
    %16 = vmax.xlane.f32.xlu0 %v15
    %v17 = vpop.xlane.xlu0 %16
    %v18 = vsub.f32 %v12, %v17
    %v19 = vmul.f32 %v18, 1.442695
    %v20 = vpow.pop %v19
    %v21 = vsel %vm14, %v20, 0.0
    %22 = vadd.xlane.f32.xlu0 %v21
    %v23 = vpop.xlane.xlu0 %22
    %v24 = vlog2.pop %v23
    %v25 = vmul.f32 %v24, 0.6931472
    %v26 = vadd.f32 %v17, %v25
    %v27 = vlaneseq
    %v28 = vand.u32 %v27, 127
    %29 = vset.pattern.permute.xlu0 0
    %30 = vperm.xlu0 %29, %v13
    %v31 = vpop.permute.xlu0 %30
    %vm32 = vcmp.eq.s32.totalorder %v28, %v31
    %v33 = vsel %vm32, %v12, 0.0
    %v34 = vsel %vm14, %v33, 0.0
    %35 = vadd.xlane.f32.xlu0 %v34
    %v36 = vpop.xlane.xlu0 %35
    %s37 = smul.u32 0, 8
    %v38 = vlaneseq
    %v39 = vshrl.u32 %v38, 7
    %v40 = vstv %s37
    %v41 = vadd.s32 %v40, %v39
    %vm42 = vcmp.lt.s32.totalorder %v41, 8
    %v43 = vsub.f32 %v26, %v36
    %v44 = vsel %vm42, %v43, 0.0
    %v45 = vrot.slane %v44, 4
    %v46 = vadd.f32 %v44, %v45
    %v47 = vrot.slane %v46, 2
    %v48 = vadd.f32 %v46, %v47
    %v49 = vrot.slane %v48, 1
    %v50 = vadd.f32 %v48, %v49
    %vm51 = vcmp.eq.s32.totalorder %v28, 0
    %v52 = vsel %vm51, %v50, 0.0
    %53 = vst [vmem:[#allocation2] sm:$0x1] %v52
    // Predicated region
    $region10: #{tpu_custom_call.1} parent=1 // pred_check
      _
    $region11: #{tpu_custom_call.1} parent=1 // pred_check_branch
      %55 = sbr.rel (0) target = $region13
    $region12: #{tpu_custom_call.1} parent=1 // pred_region
      %s57 = ssub.s32 16, 16
      %58 = vsyncadd [#allocation3], %s57
      %s60 = sshll.u32 [#allocation2], 4
      %s61 = int_to_ptr.vmem [resolvable:$true] %s60
      %63 = dma.vmem_to_hbm [thread:$0]  %s61, 16, %s2, [#allocation3]
    $region13: #{tpu_custom_call.1} parent=1 // pred_fallthru
      _
    // Predicated region
    $region14: #{tpu_custom_call.1} parent=1 // pred_check
      _
    $region15: #{tpu_custom_call.1} parent=1 // pred_check_branch
      %65 = sbr.rel (0) target = $region17
    $region16: #{tpu_custom_call.1} parent=1 // pred_region
      %66 = dma.done [#allocation3], 16
    $region17: #{tpu_custom_call.1} parent=1 // pred_fallthru
      _
    %67 = vsyncpa [#allocation3], 1

</llo_original>
